<compile_context>
chip_gen: v7x
topology: tpu7x:2x2x1
jax: 0.10.0
libtpu: 0.0.40
codegen_flags: <defaults>
</compile_context>

<pallas_src>
import functools

import jax
import jax.numpy as jnp
import numpy as np
from jax.experimental import pallas as pl
from jax.experimental.pallas import tpu as pltpu

NUM_NODE_TYPE = 119
NUM_NODE_CHIRAL = 4
NUM_EDGE_TYPE = 4
NUM_EDGE_DIRE = 3
NUM_EDGE_COMBO = NUM_EDGE_TYPE * NUM_EDGE_DIRE    # 12
CLASS_PAD = 128                                   # 119 + 4 <= 128, lane-dense
NEG = -1e30                                       # pad bias: exp->0, not argmax


def _round_up(x, m):
    return ((x + m - 1) // m) * m


def _vmem_capacity_bytes():
    """Physical VMEM per TensorCore (128 MiB v5e/v6e, 64 MiB v7x)."""
    try:
        cap = getattr(pltpu.get_tpu_info(), "vmem_capacity_bytes", None)
        if cap:
            return int(cap)
    except Exception:
        pass
    return 64 * 1024 * 1024        # conservative (v7x) fallback


def head_kernel(adj_ref, xw1_ref, c_ref, etw_ref, b1_ref, w2_ref, b2_ref,
                lab_ref, out_ref, *, num_nodes, tile_n):
    """One node tile: bf16 message passing + fused two-decoder MLP + CE/acc."""
    f32 = jnp.float32

    # int8 adjacency counts -> bf16 on the VPU; the MXU then runs a native
    # bf16 x bf16 matmul with f32 accumulation (no f32 MXU emulation).  W1 is
    # already folded into xw1, so this single dot is both decoders' layer 1.
    a = adj_ref[...].astype(jnp.bfloat16)                          # (tn, Np)
    h = jnp.dot(a, xw1_ref[...], preferred_element_type=f32)       # (tn, 2H)
    # folded edge-type/direction embedding term (12 combos) + bias + ReLU
    h = h + jnp.dot(c_ref[...], etw_ref[...], preferred_element_type=f32)
    h = h + b1_ref[...]
    h = jnp.maximum(h, 0.0)

    # fused layer-2: block-diagonal W2 -> one lane-dense (tn, 128) logits slab
    # (atom classes in cols [0,119), chirality in [119,123), rest biased NEG).
    logits = jnp.dot(h, w2_ref[...], preferred_element_type=f32) + b2_ref[...]

    col = jax.lax.broadcasted_iota(jnp.int32, logits.shape, 1)     # (tn, 128)
    lab = lab_ref[...]                                             # (tn, 2)
    nt = lab[:, 0:1]
    nct = lab[:, 1:2]
    row = jax.lax.broadcasted_iota(jnp.int32, (tile_n, 1), 0)
    valid = ((pl.program_id(0) * tile_n + row) < num_nodes).astype(f32)

    # ---- atom-type cross-entropy + first-occurrence argmax (cols [0,119)) --
    la = jnp.where(col < NUM_NODE_TYPE, logits, NEG)
    ma = jnp.max(la, axis=-1, keepdims=True)
    lse_a = ma + jnp.log(jnp.sum(jnp.exp(la - ma), axis=-1, keepdims=True))
    tgt_a = jnp.sum(jnp.where(col == nt, logits, 0.0), axis=-1, keepdims=True)
    pred_a = jnp.min(jnp.where(la == ma, col, CLASS_PAD),
                     axis=-1, keepdims=True)
    correct = (pred_a == nt).astype(f32)

    # ---- chirality cross-entropy (cols [119,123)) ---------------------------
    in_c = (col >= NUM_NODE_TYPE) & (col < NUM_NODE_TYPE + NUM_NODE_CHIRAL)
    lc = jnp.where(in_c, logits, NEG)
    mc = jnp.max(lc, axis=-1, keepdims=True)
    lse_c = mc + jnp.log(jnp.sum(jnp.exp(lc - mc), axis=-1, keepdims=True))
    tgt_c = jnp.sum(jnp.where(col == nct + NUM_NODE_TYPE, logits, 0.0),
                    axis=-1, keepdims=True)

    # per-tile reduction (padded rows masked); the epilogue lives on EUP/XLU
    # slots that are idle in this HBM-bound regime.
    loss_t = jnp.sum(((lse_a - tgt_a) + (lse_c - tgt_c)) * valid)
    corr_t = jnp.sum(correct * valid)

    # one lane-dense (1, 8, 128) row per grid step:
    #   [0,0,0] = tile loss sum, [0,0,1] = tile correct count
    orow = jax.lax.broadcasted_iota(jnp.int32, out_ref.shape, 1)
    ocol = jax.lax.broadcasted_iota(jnp.int32, out_ref.shape, 2)
    payload = jnp.where(ocol == 0, loss_t, jnp.where(ocol == 1, corr_t, 0.0))
    out_ref[...] = jnp.where(orow == 0, payload, 0.0)


@functools.partial(jax.jit, static_argnames=("node_tile",))
def graph_reconstruction_head(x, edge_index, edge_type, edge_dire_type,
                              node_type, node_chiral_type, params,
                              node_tile=None):
    f32 = jnp.float32
    N, D = x.shape
    H = params["w1a"].shape[1]
    H2 = 2 * H

    # ---- generation-aware VMEM budget & node tile ---------------------------
    cap = _vmem_capacity_bytes()
    vmem_limit = max(32 * 1024 * 1024, min(cap * 3 // 4, 100 * 1024 * 1024))

    n_min = _round_up(N, 32)       # 32 = int8 sublane tile (covers bf16/f32)
    if node_tile is None:
        # biggest node-row tile keeping: 2x int8 adjacency buffers + its bf16
        # upcast + resident bf16 xw1 + weights + f32 intermediates in budget
        resident = n_min * H2 * 2 + H2 * (NUM_EDGE_COMBO + 1 + CLASS_PAD) * 4
        per_row = 4 * n_min + 8 * H2 + 8 * CLASS_PAD + 64
        avail = max(vmem_limit - resident - (2 << 20), 32 * per_row)
        tn = int(avail // per_row)
    else:
        tn = int(node_tile)
    tn = max(32, min(1024, (tn // 32) * 32, n_min))
    n_pad = _round_up(N, tn)
    n_tiles = n_pad // tn

    src = edge_index[0].astype(jnp.int32)
    dst = edge_index[1].astype(jnp.int32)

    # ---- graph-structure glue (single pass, final 1-byte dtype) -------------
    # A_hat[i, j] = #edges j->i, +1 on the diagonal (self term appended to the
    # scatter indices, no separate eye() pass).  int8 in HBM: the kernel
    # streams 1 byte/entry.  NOTE: per-pair multiplicity (+self loop) <= 127.
    loop = jnp.arange(N, dtype=jnp.int32)
    rows = jnp.concatenate([dst, loop])
    cols = jnp.concatenate([src, loop])
    adj = jnp.zeros((n_pad, n_pad), jnp.int8).at[rows, cols].add(
        jnp.ones_like(rows, dtype=jnp.int8))
    # TODO(synk): for graphs that are static across steps, hoist adjacency /
    #             cmat construction out of the training hot path entirely.

    combo = (edge_type.astype(jnp.int32) * NUM_EDGE_DIRE
             + edge_dire_type.astype(jnp.int32))
    cmat = jnp.zeros((n_pad, NUM_EDGE_COMBO), f32).at[dst, combo].add(1.0)

    labels = (jnp.zeros((n_pad, 2), jnp.int32)
              .at[:N, 0].set(node_type.astype(jnp.int32))
              .at[:N, 1].set(node_chiral_type.astype(jnp.int32)))

    # ---- parameter / feature folding (pure function of params + x) ----------
    w1_cat = jnp.concatenate([params["w1a"], params["w1c"]], axis=1)  # (D, 2H)
    xp = jnp.zeros((n_pad, D), f32).at[:N].set(x.astype(f32))
    xw1 = jnp.dot(xp, w1_cat,
                  preferred_element_type=f32).astype(jnp.bfloat16)    # (Np,2H)

    t_a = (params["et_emb_a"][:, None, :] +
           params["ed_emb_a"][None, :, :]).reshape(NUM_EDGE_COMBO, D)
    t_c = (params["et_emb_c"][:, None, :] +
           params["ed_emb_c"][None, :, :]).reshape(NUM_EDGE_COMBO, D)
    etw_cat = jnp.concatenate([t_a @ params["w1a"],
                               t_c @ params["w1c"]], axis=1)          # (12,2H)
    b1_cat = jnp.concatenate([params["b1a"], params["b1c"]], axis=1)  # (1, 2H)

    w2_blk = jnp.zeros((H2, CLASS_PAD), f32)
    w2_blk = w2_blk.at[:H, :NUM_NODE_TYPE].set(params["w2a"])
    w2_blk = w2_blk.at[H:, NUM_NODE_TYPE:NUM_NODE_TYPE + NUM_NODE_CHIRAL].set(
        params["w2c"])
    b2_pad = jnp.full((1, CLASS_PAD), NEG, f32)
    b2_pad = b2_pad.at[0, :NUM_NODE_TYPE].set(params["b2a"][0])
    b2_pad = b2_pad.at[0, NUM_NODE_TYPE:NUM_NODE_TYPE + NUM_NODE_CHIRAL].set(
        params["b2c"][0])

    kernel = functools.partial(head_kernel, num_nodes=N, tile_n=tn)

    in_specs = [
        pl.BlockSpec((tn, n_pad), lambda i: (i, 0)),          # int8 adjacency
        pl.BlockSpec((n_pad, H2), lambda i: (0, 0)),          # bf16 x@[W1a|W1c]
        pl.BlockSpec((tn, NUM_EDGE_COMBO), lambda i: (i, 0)),  # combo counts
        pl.BlockSpec((NUM_EDGE_COMBO, H2), lambda i: (0, 0)),  # folded emb@W1
        pl.BlockSpec((1, H2), lambda i: (0, 0)),               # [b1a | b1c]
        pl.BlockSpec((H2, CLASS_PAD), lambda i: (0, 0)),       # block-diag W2
        pl.BlockSpec((1, CLASS_PAD), lambda i: (0, 0)),        # padded b2
        pl.BlockSpec((tn, 2), lambda i: (i, 0)),               # [type, chiral]
    ]
    out_specs = pl.BlockSpec((1, 8, 128), lambda i: (i, 0, 0))

    out = pl.pallas_call(
        kernel,
        out_shape=jax.ShapeDtypeStruct((n_tiles, 8, 128), f32),
        grid=(n_tiles,),
        in_specs=in_specs,
        out_specs=out_specs,
        compiler_params=pltpu.CompilerParams(
            dimension_semantics=("parallel",),     # megacore-shardable on v7x
            vmem_limit_bytes=vmem_limit),
    )(adj, xw1, cmat, etw_cat, b1_cat, w2_blk, b2_pad, labels)

    inv_n = jnp.float32(1.0 / N)                   # multiply, no runtime div
    loss = jnp.sum(out[:, 0, 0]) * inv_n
    acc = jnp.sum(out[:, 0, 1]) * inv_n
    return {"reconstruction_loss": loss, "reconstruction_accuracy": acc}


# ---------------------------- plain-JAX reference ----------------------------
def _reference_logits(x, edge_index, edge_type, edge_dire_type, params):
    src, dst = edge_index[0], edge_index[1]
    N = x.shape[0]
    dotp = functools.partial(jnp.dot, precision=jax.lax.Precision.HIGHEST)

    def decoder(ee_t, ee_d, w1, b1, w2, b2):
        msg = x[src] + ee_t[edge_type] + ee_d[edge_dire_type]
        agg = x + jax.ops.segment_sum(msg, dst, num_segments=N)
        h = jnp.maximum(dotp(agg, w1) + b1, 0.0)
        return dotp(h, w2) + b2

    la = decoder(params["et_emb_a"], params["ed_emb_a"],
                 params["w1a"], params["b1a"], params["w2a"], params["b2a"])
    lc = decoder(params["et_emb_c"], params["ed_emb_c"],
                 params["w1c"], params["b1c"], params["w2c"], params["b2c"])
    return la, lc


def _ce(logits, labels):
    lse = jax.scipy.special.logsumexp(logits, axis=-1)
    tgt = jnp.take_along_axis(logits, labels[:, None], axis=-1)[:, 0]
    return jnp.mean(lse - tgt)


def _reference(x, edge_index, edge_type, edge_dire_type,
               node_type, node_chiral_type, params):
    la, lc = _reference_logits(x, edge_index, edge_type, edge_dire_type, params)
    loss = _ce(la, node_type) + _ce(lc, node_chiral_type)
    acc = jnp.mean((jnp.argmax(la, axis=-1) == node_type).astype(jnp.float32))
    return loss, acc


def make_params(key, in_dim, hidden_dim):
    f32 = jnp.float32
    ks = jax.random.split(key, 12)

    def mk(k, shape):
        return (0.1 * jax.random.normal(k, shape)).astype(f32)

    return {
        "w1a": mk(ks[0], (in_dim, hidden_dim)),
        "b1a": mk(ks[1], (1, hidden_dim)),
        "w2a": mk(ks[2], (hidden_dim, NUM_NODE_TYPE)),
        "b2a": mk(ks[3], (1, NUM_NODE_TYPE)),
        "w1c": mk(ks[4], (in_dim, hidden_dim)),
        "b1c": mk(ks[5], (1, hidden_dim)),
        "w2c": mk(ks[6], (hidden_dim, NUM_NODE_CHIRAL)),
        "b2c": mk(ks[7], (1, NUM_NODE_CHIRAL)),
        "et_emb_a": mk(ks[8], (NUM_EDGE_TYPE, in_dim)),
        "ed_emb_a": mk(ks[9], (NUM_EDGE_DIRE, in_dim)),
        "et_emb_c": mk(ks[10], (NUM_EDGE_TYPE, in_dim)),
        "ed_emb_c": mk(ks[11], (NUM_EDGE_DIRE, in_dim)),
    }


if __name__ == "__main__":
    key = jax.random.PRNGKey(0)
    k_x, k_src, k_dst, k_et, k_ed, k_nt, k_nc, k_p = jax.random.split(key, 8)

    # N not a multiple of the 32-row tile -> exercises padding / masking, and
    # node_tile=32 gives a 4-step grid at this toy size.
    N, E, IN_DIM, HID_DIM = 100, 260, 32, 64

    x = jax.random.normal(k_x, (N, IN_DIM), dtype=jnp.float32)
    edge_index = jnp.stack([
        jax.random.randint(k_src, (E,), 0, N),
        jax.random.randint(k_dst, (E,), 0, N),
    ], axis=0).astype(jnp.int32)
    edge_type = jax.random.randint(k_et, (E,), 0, NUM_EDGE_TYPE).astype(jnp.int32)
    edge_dire_type = jax.random.randint(k_ed, (E,), 0, NUM_EDGE_DIRE).astype(jnp.int32)
    node_type = jax.random.randint(k_nt, (N,), 0, NUM_NODE_TYPE).astype(jnp.int32)
    node_chiral_type = jax.random.randint(k_nc, (N,), 0, NUM_NODE_CHIRAL).astype(jnp.int32)

    params = make_params(k_p, IN_DIM, HID_DIM)

    # Make half the atom labels equal the f32-reference argmax so the
    # reference accuracy (~0.5) sits far from the 1/119 chance level and the
    # kernel's argmax / masking path is genuinely exercised by the assert.
    la_ref, _ = _reference_logits(x, edge_index, edge_type, edge_dire_type, params)
    pred_ref = jnp.argmax(la_ref, axis=-1).astype(jnp.int32)
    node_type = jnp.where(jnp.arange(N) % 2 == 0, pred_ref, node_type)

    out = graph_reconstruction_head(x, edge_index, edge_type, edge_dire_type,
                                    node_type, node_chiral_type, params,
                                    node_tile=32)
    jax.block_until_ready(out)

    ref_loss, ref_acc = _reference(x, edge_index, edge_type, edge_dire_type,
                                   node_type, node_chiral_type, params)
    # bf16 node features on the MXU path -> small deviations vs the f32
    # reference; loss tolerance loosened accordingly and the argmax-based
    # accuracy is allowed a handful of bf16-induced near-tie flips.
    np.testing.assert_allclose(np.array(out["reconstruction_loss"]),
                               np.array(ref_loss), rtol=5e-3, atol=5e-3)
    np.testing.assert_allclose(np.array(out["reconstruction_accuracy"]),
                               np.array(ref_acc), atol=0.07)

    print("KERNEL_OK")
</pallas_src>

<mosaic_0001>
module attributes {stable_mosaic.version = 11 : i64} {
  func.func @head_kernel(%arg0: i32, %arg1: memref<32x128xi8, #tpu.memory_space<vmem>>, %arg2: memref<128x128xbf16, #tpu.memory_space<vmem>>, %arg3: memref<32x12xf32, #tpu.memory_space<vmem>>, %arg4: memref<12x128xf32, #tpu.memory_space<vmem>>, %arg5: memref<1x128xf32, #tpu.memory_space<vmem>>, %arg6: memref<128x128xf32, #tpu.memory_space<vmem>>, %arg7: memref<1x128xf32, #tpu.memory_space<vmem>>, %arg8: memref<32x2xi32, #tpu.memory_space<vmem>>, %arg9: memref<1x8x128xf32, #tpu.memory_space<vmem>>) attributes {dimension_semantics = [#tpu.dimension_semantics<parallel>], iteration_bounds = array<i64: 4>, scalar_prefetch = 0 : i64, scratch_operands = 0 : i64, tpu.core_type = #tpu.core_type<tc>, window_params = [{transform_indices = @transform_0, window_bounds = array<i64: 32, 128>}, {pipeline_mode = #tpu.pipeline_mode<synchronous>, transform_indices = @transform_1, window_bounds = array<i64: 128, 128>}, {transform_indices = @transform_2, window_bounds = array<i64: 32, 12>}, {pipeline_mode = #tpu.pipeline_mode<synchronous>, transform_indices = @transform_3, window_bounds = array<i64: 12, 128>}, {pipeline_mode = #tpu.pipeline_mode<synchronous>, transform_indices = @transform_4, window_bounds = array<i64: 1, 128>}, {pipeline_mode = #tpu.pipeline_mode<synchronous>, transform_indices = @transform_5, window_bounds = array<i64: 128, 128>}, {pipeline_mode = #tpu.pipeline_mode<synchronous>, transform_indices = @transform_6, window_bounds = array<i64: 1, 128>}, {transform_indices = @transform_7, window_bounds = array<i64: 32, 2>}, {transform_indices = @transform_8, window_bounds = array<i64: 1, 8, 128>}]} {
    %c0 = arith.constant 0 : index
    %c0_0 = arith.constant 0 : index
    %0 = vector.load %arg1[%c0, %c0_0] : memref<32x128xi8, #tpu.memory_space<vmem>>, vector<32x128xi8>
    %1 = arith.sitofp %0 : vector<32x128xi8> to vector<32x128xbf16>
    %c0_1 = arith.constant 0 : index
    %c0_2 = arith.constant 0 : index
    %2 = vector.load %arg2[%c0_1, %c0_2] : memref<128x128xbf16, #tpu.memory_space<vmem>>, vector<128x128xbf16>
    %cst = arith.constant dense<0.000000e+00> : vector<32x128xf32>
    %3 = tpu.matmul %1, %2, %cst {dimension_numbers = #tpu.dot_dimension_numbers<[1], [0], [0], [1], [0, 0, 1, 1], [], []>} : vector<32x128xbf16>, vector<128x128xbf16>, vector<32x128xf32> -> vector<32x128xf32>
    %c0_3 = arith.constant 0 : index
    %c0_4 = arith.constant 0 : index
    %4 = vector.load %arg3[%c0_3, %c0_4] : memref<32x12xf32, #tpu.memory_space<vmem>>, vector<32x12xf32>
    %c0_5 = arith.constant 0 : index
    %c0_6 = arith.constant 0 : index
    %5 = vector.load %arg4[%c0_5, %c0_6] : memref<12x128xf32, #tpu.memory_space<vmem>>, vector<12x128xf32>
    %cst_7 = arith.constant dense<0.000000e+00> : vector<32x128xf32>
    %6 = tpu.matmul %4, %5, %cst_7 {dimension_numbers = #tpu.dot_dimension_numbers<[1], [0], [0], [1], [0, 0, 1, 1], [], []>} : vector<32x12xf32>, vector<12x128xf32>, vector<32x128xf32> -> vector<32x128xf32>
    %7 = arith.addf %3, %6 : vector<32x128xf32>
    %c0_8 = arith.constant 0 : index
    %c0_9 = arith.constant 0 : index
    %8 = vector.load %arg5[%c0_8, %c0_9] : memref<1x128xf32, #tpu.memory_space<vmem>>, vector<1x128xf32>
    %9 = vector.broadcast %8 : vector<1x128xf32> to vector<32x128xf32>
    %10 = arith.addf %7, %9 : vector<32x128xf32>
    %cst_10 = arith.constant 0.000000e+00 : f32
    %11 = vector.broadcast %cst_10 : f32 to vector<32x128xf32>
    %12 = arith.maximumf %10, %11 : vector<32x128xf32>
    %c0_11 = arith.constant 0 : index
    %c0_12 = arith.constant 0 : index
    %13 = vector.load %arg6[%c0_11, %c0_12] : memref<128x128xf32, #tpu.memory_space<vmem>>, vector<128x128xf32>
    %cst_13 = arith.constant dense<0.000000e+00> : vector<32x128xf32>
    %14 = tpu.matmul %12, %13, %cst_13 {dimension_numbers = #tpu.dot_dimension_numbers<[1], [0], [0], [1], [0, 0, 1, 1], [], []>} : vector<32x128xf32>, vector<128x128xf32>, vector<32x128xf32> -> vector<32x128xf32>
    %c0_14 = arith.constant 0 : index
    %c0_15 = arith.constant 0 : index
    %15 = vector.load %arg7[%c0_14, %c0_15] : memref<1x128xf32, #tpu.memory_space<vmem>>, vector<1x128xf32>
    %16 = vector.broadcast %15 : vector<1x128xf32> to vector<32x128xf32>
    %17 = arith.addf %14, %16 : vector<32x128xf32>
    %18 = tpu.iota {dimensions = array<i32: 1>} : vector<32x128xi32>
    %c0_16 = arith.constant 0 : index
    %c0_17 = arith.constant 0 : index
    %19 = vector.load %arg8[%c0_16, %c0_17] : memref<32x2xi32, #tpu.memory_space<vmem>>, vector<32x2xi32>
    %20 = vector.extract_strided_slice %19 {offsets = [0, 0], sizes = [32, 1], strides = [1, 1]} : vector<32x2xi32> to vector<32x1xi32>
    %21 = vector.extract_strided_slice %19 {offsets = [0, 1], sizes = [32, 1], strides = [1, 1]} : vector<32x2xi32> to vector<32x1xi32>
    %22 = tpu.iota {dimensions = array<i32: 0>} : vector<32x1xi32>
    %c32_i32 = arith.constant 32 : i32
    %23 = arith.muli %arg0, %c32_i32 : i32
    %24 = vector.broadcast %23 : i32 to vector<32x1xi32>
    %25 = arith.addi %24, %22 : vector<32x1xi32>
    %c100_i32 = arith.constant 100 : i32
    %26 = vector.broadcast %c100_i32 : i32 to vector<32x1xi32>
    %27 = arith.cmpi slt, %25, %26 : vector<32x1xi32>
    %28 = arith.extui %27 : vector<32x1xi1> to vector<32x1xi32>
    %29 = arith.sitofp %28 : vector<32x1xi32> to vector<32x1xf32>
    %c119_i32 = arith.constant 119 : i32
    %30 = vector.broadcast %c119_i32 : i32 to vector<32x128xi32>
    %31 = arith.cmpi slt, %18, %30 : vector<32x128xi32>
    %cst_18 = arith.constant -1.000000e+30 : f32
    %32 = vector.broadcast %cst_18 : f32 to vector<32x128xf32>
    %33 = arith.select %31, %17, %32 : vector<32x128xi1>, vector<32x128xf32>
    %cst_19 = arith.constant dense<0xFF800000> : vector<32xf32>
    %34 = vector.multi_reduction <maximumf>, %33, %cst_19 [1] : vector<32x128xf32> to vector<32xf32>
    %35 = vector.shape_cast %34 : vector<32xf32> to vector<32x1xf32>
    %36 = vector.broadcast %35 : vector<32x1xf32> to vector<32x128xf32>
    %37 = arith.subf %33, %36 : vector<32x128xf32>
    %38 = math.exp %37 : vector<32x128xf32>
    %cst_20 = arith.constant dense<0.000000e+00> : vector<32xf32>
    %39 = vector.multi_reduction <add>, %38, %cst_20 [1] : vector<32x128xf32> to vector<32xf32>
    %40 = vector.shape_cast %39 : vector<32xf32> to vector<32x1xf32>
    %41 = math.log %40 : vector<32x1xf32>
    %42 = arith.addf %35, %41 : vector<32x1xf32>
    %43 = vector.broadcast %20 : vector<32x1xi32> to vector<32x128xi32>
    %44 = arith.cmpi eq, %18, %43 : vector<32x128xi32>
    %cst_21 = arith.constant 0.000000e+00 : f32
    %45 = vector.broadcast %cst_21 : f32 to vector<32x128xf32>
    %46 = arith.select %44, %17, %45 : vector<32x128xi1>, vector<32x128xf32>
    %cst_22 = arith.constant dense<0.000000e+00> : vector<32xf32>
    %47 = vector.multi_reduction <add>, %46, %cst_22 [1] : vector<32x128xf32> to vector<32xf32>
    %48 = vector.shape_cast %47 : vector<32xf32> to vector<32x1xf32>
    %49 = vector.broadcast %35 : vector<32x1xf32> to vector<32x128xf32>
    %50 = arith.cmpf oeq, %33, %49 : vector<32x128xf32>
    %c128_i32 = arith.constant 128 : i32
    %51 = vector.broadcast %c128_i32 : i32 to vector<32x128xi32>
    %52 = arith.select %50, %18, %51 : vector<32x128xi1>, vector<32x128xi32>
    %cst_23 = arith.constant dense<2147483647> : vector<32xi32>
    %53 = vector.multi_reduction <minsi>, %52, %cst_23 [1] : vector<32x128xi32> to vector<32xi32>
    %54 = vector.shape_cast %53 : vector<32xi32> to vector<32x1xi32>
    %55 = arith.cmpi eq, %54, %20 : vector<32x1xi32>
    %56 = arith.extui %55 : vector<32x1xi1> to vector<32x1xi32>
    %57 = arith.sitofp %56 : vector<32x1xi32> to vector<32x1xf32>
    %c119_i32_24 = arith.constant 119 : i32
    %58 = vector.broadcast %c119_i32_24 : i32 to vector<32x128xi32>
    %59 = arith.cmpi sge, %18, %58 : vector<32x128xi32>
    %c123_i32 = arith.constant 123 : i32
    %60 = vector.broadcast %c123_i32 : i32 to vector<32x128xi32>
    %61 = arith.cmpi slt, %18, %60 : vector<32x128xi32>
    %62 = arith.andi %59, %61 : vector<32x128xi1>
    %cst_25 = arith.constant -1.000000e+30 : f32
    %63 = vector.broadcast %cst_25 : f32 to vector<32x128xf32>
    %64 = arith.select %62, %17, %63 : vector<32x128xi1>, vector<32x128xf32>
    %cst_26 = arith.constant dense<0xFF800000> : vector<32xf32>
    %65 = vector.multi_reduction <maximumf>, %64, %cst_26 [1] : vector<32x128xf32> to vector<32xf32>
    %66 = vector.shape_cast %65 : vector<32xf32> to vector<32x1xf32>
    %67 = vector.broadcast %66 : vector<32x1xf32> to vector<32x128xf32>
    %68 = arith.subf %64, %67 : vector<32x128xf32>
    %69 = math.exp %68 : vector<32x128xf32>
    %cst_27 = arith.constant dense<0.000000e+00> : vector<32xf32>
    %70 = vector.multi_reduction <add>, %69, %cst_27 [1] : vector<32x128xf32> to vector<32xf32>
    %71 = vector.shape_cast %70 : vector<32xf32> to vector<32x1xf32>
    %72 = math.log %71 : vector<32x1xf32>
    %73 = arith.addf %66, %72 : vector<32x1xf32>
    %c119_i32_28 = arith.constant 119 : i32
    %74 = vector.broadcast %c119_i32_28 : i32 to vector<32x1xi32>
    %75 = arith.addi %21, %74 : vector<32x1xi32>
    %76 = vector.broadcast %75 : vector<32x1xi32> to vector<32x128xi32>
    %77 = arith.cmpi eq, %18, %76 : vector<32x128xi32>
    %cst_29 = arith.constant 0.000000e+00 : f32
    %78 = vector.broadcast %cst_29 : f32 to vector<32x128xf32>
    %79 = arith.select %77, %17, %78 : vector<32x128xi1>, vector<32x128xf32>
    %cst_30 = arith.constant dense<0.000000e+00> : vector<32xf32>
    %80 = vector.multi_reduction <add>, %79, %cst_30 [1] : vector<32x128xf32> to vector<32xf32>
    %81 = vector.shape_cast %80 : vector<32xf32> to vector<32x1xf32>
    %82 = arith.subf %42, %48 : vector<32x1xf32>
    %83 = arith.subf %73, %81 : vector<32x1xf32>
    %84 = arith.addf %82, %83 : vector<32x1xf32>
    %85 = arith.mulf %84, %29 : vector<32x1xf32>
    %86 = vector.shape_cast %85 : vector<32x1xf32> to vector<1x32x1xf32>
    %cst_31 = arith.constant dense<0.000000e+00> : vector<1xf32>
    %87 = vector.multi_reduction <add>, %86, %cst_31 [1, 2] : vector<1x32x1xf32> to vector<1xf32>
    %88 = vector.shape_cast %87 : vector<1xf32> to vector<1x1x1xf32>
    %89 = vector.extract %88[0, 0, 0] : f32 from vector<1x1x1xf32>
    %90 = arith.mulf %57, %29 : vector<32x1xf32>
    %91 = vector.shape_cast %90 : vector<32x1xf32> to vector<1x32x1xf32>
    %cst_32 = arith.constant dense<0.000000e+00> : vector<1xf32>
    %92 = vector.multi_reduction <add>, %91, %cst_32 [1, 2] : vector<1x32x1xf32> to vector<1xf32>
    %93 = vector.shape_cast %92 : vector<1xf32> to vector<1x1x1xf32>
    %94 = vector.extract %93[0, 0, 0] : f32 from vector<1x1x1xf32>
    %95 = tpu.iota {dimensions = array<i32: 1>} : vector<1x8x128xi32>
    %96 = tpu.iota {dimensions = array<i32: 2>} : vector<1x8x128xi32>
    %c0_i32 = arith.constant 0 : i32
    %97 = vector.broadcast %c0_i32 : i32 to vector<1x8x128xi32>
    %98 = arith.cmpi eq, %96, %97 : vector<1x8x128xi32>
    %c1_i32 = arith.constant 1 : i32
    %99 = vector.broadcast %c1_i32 : i32 to vector<1x8x128xi32>
    %100 = arith.cmpi eq, %96, %99 : vector<1x8x128xi32>
    %cst_33 = arith.constant 0.000000e+00 : f32
    %101 = vector.broadcast %94 : f32 to vector<1x8x128xf32>
    %102 = vector.broadcast %cst_33 : f32 to vector<1x8x128xf32>
    %103 = arith.select %100, %101, %102 : vector<1x8x128xi1>, vector<1x8x128xf32>
    %104 = vector.broadcast %89 : f32 to vector<1x8x128xf32>
    %105 = arith.select %98, %104, %103 : vector<1x8x128xi1>, vector<1x8x128xf32>
    %c0_i32_34 = arith.constant 0 : i32
    %106 = vector.broadcast %c0_i32_34 : i32 to vector<1x8x128xi32>
    %107 = arith.cmpi eq, %95, %106 : vector<1x8x128xi32>
    %cst_35 = arith.constant 0.000000e+00 : f32
    %108 = vector.broadcast %cst_35 : f32 to vector<1x8x128xf32>
    %109 = arith.select %107, %105, %108 : vector<1x8x128xi1>, vector<1x8x128xf32>
    %c0_36 = arith.constant 0 : index
    %c0_37 = arith.constant 0 : index
    %c0_38 = arith.constant 0 : index
    %110 = vector.load %arg9[%c0_36, %c0_37, %c0_38] : memref<1x8x128xf32, #tpu.memory_space<vmem>>, vector<1x8x128xf32>
    tpu.vector_store %arg9[%c0_36, %c0_37, %c0_38], %109 {strides = array<i32>} : memref<1x8x128xf32, #tpu.memory_space<vmem>>, vector<1x8x128xf32>,
    return
  }
  func.func @transform_0(%arg0: i32) -> (i32, i32) {
    %c0_i32 = arith.constant 0 : i32
    %c0_i32_0 = arith.constant 0 : i32
    return %arg0, %c0_i32 : i32, i32
  }
  func.func @transform_1(%arg0: i32) -> (i32, i32) {
    %c0_i32 = arith.constant 0 : i32
    %c0_i32_0 = arith.constant 0 : i32
    %c0_i32_1 = arith.constant 0 : i32
    return %c0_i32, %c0_i32_0 : i32, i32
  }
  func.func @transform_2(%arg0: i32) -> (i32, i32) {
    %c0_i32 = arith.constant 0 : i32
    %c0_i32_0 = arith.constant 0 : i32
    return %arg0, %c0_i32 : i32, i32
  }
  func.func @transform_3(%arg0: i32) -> (i32, i32) {
    %c0_i32 = arith.constant 0 : i32
    %c0_i32_0 = arith.constant 0 : i32
    %c0_i32_1 = arith.constant 0 : i32
    return %c0_i32, %c0_i32_0 : i32, i32
  }
  func.func @transform_4(%arg0: i32) -> (i32, i32) {
    %c0_i32 = arith.constant 0 : i32
    %c0_i32_0 = arith.constant 0 : i32
    %c0_i32_1 = arith.constant 0 : i32
    return %c0_i32, %c0_i32_0 : i32, i32
  }
  func.func @transform_5(%arg0: i32) -> (i32, i32) {
    %c0_i32 = arith.constant 0 : i32
    %c0_i32_0 = arith.constant 0 : i32
    %c0_i32_1 = arith.constant 0 : i32
    return %c0_i32, %c0_i32_0 : i32, i32
  }
  func.func @transform_6(%arg0: i32) -> (i32, i32) {
    %c0_i32 = arith.constant 0 : i32
    %c0_i32_0 = arith.constant 0 : i32
    %c0_i32_1 = arith.constant 0 : i32
    return %c0_i32, %c0_i32_0 : i32, i32
  }
  func.func @transform_7(%arg0: i32) -> (i32, i32) {
    %c0_i32 = arith.constant 0 : i32
    %c0_i32_0 = arith.constant 0 : i32
    return %arg0, %c0_i32 : i32, i32
  }
  func.func @transform_8(%arg0: i32) -> (i32, i32, i32) {
    %c0_i32 = arith.constant 0 : i32
    %c0_i32_0 = arith.constant 0 : i32
    %c0_i32_1 = arith.constant 0 : i32
    return %arg0, %c0_i32, %c0_i32_0 : i32, i32, i32
  }
}

</mosaic_0001>

<llo_original>
// kernel: graph_reconstruction_head.1
$region0: #{graph_reconstruction_head.1}
  #allocation0 [shape = 'u32[]', space=smem, size = 0x4, offset = 0x4, fixed_abs, tag = 'smem constant byte address 0x4 - core index']
  #allocation1 [shape = 'u32[144,128]{1,0:T(1,128)}', space=vmem, size = 0x12000, scoped, tag = 'internal scratch']
  %s0 = inlined_call_operand.vmem [shape: s8[128,128], index: 0, kind: input, shape index: {}]
  %s1 = inlined_call_operand.vmem [shape: bf16[128,128], index: 1, kind: input, shape index: {}]
  %s2 = inlined_call_operand.vmem [shape: f32[128,12], index: 2, kind: input, shape index: {}]
  %s3 = inlined_call_operand.vmem [shape: f32[12,128], index: 3, kind: input, shape index: {}]
  %s4 = inlined_call_operand.vmem [shape: f32[1,128], index: 4, kind: input, shape index: {}]
  %s5 = inlined_call_operand.vmem [shape: f32[128,128], index: 5, kind: input, shape index: {}]
  %s6 = inlined_call_operand.vmem [shape: f32[1,128], index: 6, kind: input, shape index: {}]
  %s7 = inlined_call_operand.vmem [shape: s32[128,2], index: 7, kind: input, shape index: {}]
  %s8 = inlined_call_operand.vmem [shape: f32[4,8,128], index: 8, kind: output, shape index: {}]
  %s9 = sld [smem:[#allocation0]]
  $region65: #{graph_reconstruction_head.1} parent=0
    _
  %s11 = ssub.s32 1, %s9
  %s12 = scalar_select 0, %s11, %s9
  loop: start=0, step=1, limit=6
  $region2: #{graph_reconstruction_head.1} parent=0 // loop_pre_header
    _
  $region3: #{graph_reconstruction_head.1} parent=0 // loop_header
    %s14 = sphi 0, %s18
    %p15 = scmp.ge.s32.totalorder %s14, 6
    %s24 = sphi 0, %s26
    %s27 = sphi 0, %s24
    %s28 = sphi 0, %s27
    %s44 = sphi 0, %s28
    %s48 = sphi 0, %s48
    %s50 = sphi 0, %s48
    %s51 = sphi 0, %s50
    %s65 = sphi 0, %s51
    %s71 = sphi 0, %s73
    %s74 = sphi 0, %s71
    %s75 = sphi 0, %s74
    %s91 = sphi 0, %s75
    %s95 = sphi 0, %s95
    %s97 = sphi 0, %s95
    %s98 = sphi 0, %s97
    %s112 = sphi 0, %s98
    %s116 = sphi 0, %s116
    %s118 = sphi 0, %s116
    %s119 = sphi 0, %s118
    %s133 = sphi 0, %s119
    %s137 = sphi 0, %s137
    %s139 = sphi 0, %s137
    %s140 = sphi 0, %s139
    %s154 = sphi 0, %s140
    %s158 = sphi 0, %s158
    %s160 = sphi 0, %s158
    %s161 = sphi 0, %s160
    %s175 = sphi 0, %s161
    %s181 = sphi 0, %s183
    %s184 = sphi 0, %s181
    %s185 = sphi 0, %s184
    %s201 = sphi 0, %s185
    %s207 = sphi 0, %s209
    %s210 = sphi 0, %s207
    %s211 = sphi 0, %s210
    %s227 = sphi 0, %s211
  $region4: #{graph_reconstruction_head.1} parent=0 // loop_header_branch
    %17 = sbr.rel (%p15) target = $region8
  $region5: #{graph_reconstruction_head.1} parent=0 // loop_body
    %s19 = ssub.s32 %s14, 1
    %s20 = ssub.s32 %s14, 2
    %s21 = sadd.s32 %s14, 1
    %s22 = ssub.s32 %s14, %s21
    %p23 = scmp.eq.s32.totalorder %s22, 0
    %s25 = sadd.s32 %s24, 1
    %s26 = scalar_select %p23, %s24, %s25
    %p29 = pneg %p23
    %p30 = scmp.eq.s32.totalorder %s14, 3
    %p31 = por %p29, %p30
    %p32 = scmp.ne.s32.totalorder %s24, %s27
    %p33 = scmp.eq.s32.totalorder %s14, 0
    %p34 = por %p32, %p33
    %p35 = scmp.ne.s32.totalorder %s24, %s27
    %p36 = scmp.eq.s32.totalorder %s19, 3
    %p37 = por %p35, %p36
    %p38 = scmp.ne.s32.totalorder %s27, %s28
    %p39 = scmp.eq.s32.totalorder %s19, 0
    %p40 = por %p38, %p39
    %p41 = scmp.ne.s32.totalorder %s27, %s28
    %p42 = scmp.eq.s32.totalorder %s20, 3
    %p43 = por %p41, %p42
    %p45 = scmp.ne.s32.totalorder %s28, %s44
    %p46 = scmp.eq.s32.totalorder %s20, 0
    %p47 = por %p45, %p46
    %s49 = sadd.s32 %s48, 1
    %p52 = scmp.eq.s32.totalorder %s14, 3
    %p53 = scmp.ne.s32.totalorder %s48, %s50
    %p54 = scmp.eq.s32.totalorder %s14, 0
    %p55 = por %p53, %p54
    %p56 = scmp.ne.s32.totalorder %s48, %s50
    %p57 = scmp.eq.s32.totalorder %s19, 3
    %p58 = por %p56, %p57
    %p59 = scmp.ne.s32.totalorder %s50, %s51
    %p60 = scmp.eq.s32.totalorder %s19, 0
    %p61 = por %p59, %p60
    %p62 = scmp.ne.s32.totalorder %s50, %s51
    %p63 = scmp.eq.s32.totalorder %s20, 3
    %p64 = por %p62, %p63
    %p66 = scmp.ne.s32.totalorder %s51, %s65
    %p67 = scmp.eq.s32.totalorder %s20, 0
    %p68 = por %p66, %p67
    %s69 = ssub.s32 %s14, %s21
    %p70 = scmp.eq.s32.totalorder %s69, 0
    %s72 = sadd.s32 %s71, 1
    %s73 = scalar_select %p70, %s71, %s72
    %p76 = pneg %p70
    %p77 = scmp.eq.s32.totalorder %s14, 3
    %p78 = por %p76, %p77
    %p79 = scmp.ne.s32.totalorder %s71, %s74
    %p80 = scmp.eq.s32.totalorder %s14, 0
    %p81 = por %p79, %p80
    %p82 = scmp.ne.s32.totalorder %s71, %s74
    %p83 = scmp.eq.s32.totalorder %s19, 3
    %p84 = por %p82, %p83
    %p85 = scmp.ne.s32.totalorder %s74, %s75
    %p86 = scmp.eq.s32.totalorder %s19, 0
    %p87 = por %p85, %p86
    %p88 = scmp.ne.s32.totalorder %s74, %s75
    %p89 = scmp.eq.s32.totalorder %s20, 3
    %p90 = por %p88, %p89
    %p92 = scmp.ne.s32.totalorder %s75, %s91
    %p93 = scmp.eq.s32.totalorder %s20, 0
    %p94 = por %p92, %p93
    %s96 = sadd.s32 %s95, 1
    %p99 = scmp.eq.s32.totalorder %s14, 3
    %p100 = scmp.ne.s32.totalorder %s95, %s97
    %p101 = scmp.eq.s32.totalorder %s14, 0
    %p102 = por %p100, %p101
    %p103 = scmp.ne.s32.totalorder %s95, %s97
    %p104 = scmp.eq.s32.totalorder %s19, 3
    %p105 = por %p103, %p104
    %p106 = scmp.ne.s32.totalorder %s97, %s98
    %p107 = scmp.eq.s32.totalorder %s19, 0
    %p108 = por %p106, %p107
    %p109 = scmp.ne.s32.totalorder %s97, %s98
    %p110 = scmp.eq.s32.totalorder %s20, 3
    %p111 = por %p109, %p110
    %p113 = scmp.ne.s32.totalorder %s98, %s112
    %p114 = scmp.eq.s32.totalorder %s20, 0
    %p115 = por %p113, %p114
    %s117 = sadd.s32 %s116, 1
    %p120 = scmp.eq.s32.totalorder %s14, 3
    %p121 = scmp.ne.s32.totalorder %s116, %s118
    %p122 = scmp.eq.s32.totalorder %s14, 0
    %p123 = por %p121, %p122
    %p124 = scmp.ne.s32.totalorder %s116, %s118
    %p125 = scmp.eq.s32.totalorder %s19, 3
    %p126 = por %p124, %p125
    %p127 = scmp.ne.s32.totalorder %s118, %s119
    %p128 = scmp.eq.s32.totalorder %s19, 0
    %p129 = por %p127, %p128
    %p130 = scmp.ne.s32.totalorder %s118, %s119
    %p131 = scmp.eq.s32.totalorder %s20, 3
    %p132 = por %p130, %p131
    %p134 = scmp.ne.s32.totalorder %s119, %s133
    %p135 = scmp.eq.s32.totalorder %s20, 0
    %p136 = por %p134, %p135
    %s138 = sadd.s32 %s137, 1
    %p141 = scmp.eq.s32.totalorder %s14, 3
    %p142 = scmp.ne.s32.totalorder %s137, %s139
    %p143 = scmp.eq.s32.totalorder %s14, 0
    %p144 = por %p142, %p143
    %p145 = scmp.ne.s32.totalorder %s137, %s139
    %p146 = scmp.eq.s32.totalorder %s19, 3
    %p147 = por %p145, %p146
    %p148 = scmp.ne.s32.totalorder %s139, %s140
    %p149 = scmp.eq.s32.totalorder %s19, 0
    %p150 = por %p148, %p149
    %p151 = scmp.ne.s32.totalorder %s139, %s140
    %p152 = scmp.eq.s32.totalorder %s20, 3
    %p153 = por %p151, %p152
    %p155 = scmp.ne.s32.totalorder %s140, %s154
    %p156 = scmp.eq.s32.totalorder %s20, 0
    %p157 = por %p155, %p156
    %s159 = sadd.s32 %s158, 1
    %p162 = scmp.eq.s32.totalorder %s14, 3
    %p163 = scmp.ne.s32.totalorder %s158, %s160
    %p164 = scmp.eq.s32.totalorder %s14, 0
    %p165 = por %p163, %p164
    %p166 = scmp.ne.s32.totalorder %s158, %s160
    %p167 = scmp.eq.s32.totalorder %s19, 3
    %p168 = por %p166, %p167
    %p169 = scmp.ne.s32.totalorder %s160, %s161
    %p170 = scmp.eq.s32.totalorder %s19, 0
    %p171 = por %p169, %p170
    %p172 = scmp.ne.s32.totalorder %s160, %s161
    %p173 = scmp.eq.s32.totalorder %s20, 3
    %p174 = por %p172, %p173
    %p176 = scmp.ne.s32.totalorder %s161, %s175
    %p177 = scmp.eq.s32.totalorder %s20, 0
    %p178 = por %p176, %p177
    %s179 = ssub.s32 %s14, %s21
    %p180 = scmp.eq.s32.totalorder %s179, 0
    %s182 = sadd.s32 %s181, 1
    %s183 = scalar_select %p180, %s181, %s182
    %p186 = pneg %p180
    %p187 = scmp.eq.s32.totalorder %s14, 3
    %p188 = por %p186, %p187
    %p189 = scmp.ne.s32.totalorder %s181, %s184
    %p190 = scmp.eq.s32.totalorder %s14, 0
    %p191 = por %p189, %p190
    %p192 = scmp.ne.s32.totalorder %s181, %s184
    %p193 = scmp.eq.s32.totalorder %s19, 3
    %p194 = por %p192, %p193
    %p195 = scmp.ne.s32.totalorder %s184, %s185
    %p196 = scmp.eq.s32.totalorder %s19, 0
    %p197 = por %p195, %p196
    %p198 = scmp.ne.s32.totalorder %s184, %s185
    %p199 = scmp.eq.s32.totalorder %s20, 3
    %p200 = por %p198, %p199
    %p202 = scmp.ne.s32.totalorder %s185, %s201
    %p203 = scmp.eq.s32.totalorder %s20, 0
    %p204 = por %p202, %p203
    %s205 = ssub.s32 %s14, %s21
    %p206 = scmp.eq.s32.totalorder %s205, 0
    %s208 = sadd.s32 %s207, 1
    %s209 = scalar_select %p206, %s207, %s208
    %p212 = pneg %p206
    %p213 = scmp.eq.s32.totalorder %s14, 3
    %p214 = por %p212, %p213
    %p215 = scmp.ne.s32.totalorder %s207, %s210
    %p216 = scmp.eq.s32.totalorder %s14, 0
    %p217 = por %p215, %p216
    %p218 = scmp.ne.s32.totalorder %s207, %s210
    %p219 = scmp.eq.s32.totalorder %s19, 3
    %p220 = por %p218, %p219
    %p221 = scmp.ne.s32.totalorder %s210, %s211
    %p222 = scmp.eq.s32.totalorder %s19, 0
    %p223 = por %p221, %p222
    %p224 = scmp.ne.s32.totalorder %s210, %s211
    %p225 = scmp.eq.s32.totalorder %s20, 3
    %p226 = por %p224, %p225
    %p228 = scmp.ne.s32.totalorder %s211, %s227
    %p229 = scmp.eq.s32.totalorder %s20, 0
    %p230 = por %p228, %p229
    %p231 = scmp.le.s32.totalorder 1, %s14
    %p232 = scmp.lt.s32.totalorder %s14, 5
    %p233 = pnand %p231, %p232
    %p234 = pneg %p233
    // Predicated region
    $region9: #{graph_reconstruction_head.1} parent=5 // pred_check
      _
    $region10: #{graph_reconstruction_head.1} parent=5 // pred_check_branch
      %236 = sbr.rel (%p233) target = $region12
    $region11: #{graph_reconstruction_head.1} parent=5 // pred_region
      %s237 = ssub.s32 %s14, 1
      // Predicated region
      $region13: #{graph_reconstruction_head.1} parent=11 // pred_check
        %p238 = pneg %p61
      $region14: #{graph_reconstruction_head.1} parent=11 // pred_check_branch
        %240 = sbr.rel (%p238) target = $region16
      $region15: #{graph_reconstruction_head.1} parent=11 // pred_region
        _
      $region16: #{graph_reconstruction_head.1} parent=11 // pred_fallthru
        _
      // Predicated region
      $region17: #{graph_reconstruction_head.1} parent=11 // pred_check
        %p241 = pneg %p108
      $region18: #{graph_reconstruction_head.1} parent=11 // pred_check_branch
        %243 = sbr.rel (%p241) target = $region20
      $region19: #{graph_reconstruction_head.1} parent=11 // pred_region
        _
      $region20: #{graph_reconstruction_head.1} parent=11 // pred_fallthru
        _
      // Predicated region
      $region21: #{graph_reconstruction_head.1} parent=11 // pred_check
        %p244 = pneg %p129
      $region22: #{graph_reconstruction_head.1} parent=11 // pred_check_branch
        %246 = sbr.rel (%p244) target = $region24
      $region23: #{graph_reconstruction_head.1} parent=11 // pred_region
        _
      $region24: #{graph_reconstruction_head.1} parent=11 // pred_fallthru
        _
      // Predicated region
      $region25: #{graph_reconstruction_head.1} parent=11 // pred_check
        %p247 = pneg %p150
      $region26: #{graph_reconstruction_head.1} parent=11 // pred_check_branch
        %249 = sbr.rel (%p247) target = $region28
      $region27: #{graph_reconstruction_head.1} parent=11 // pred_region
        _
      $region28: #{graph_reconstruction_head.1} parent=11 // pred_fallthru
        _
      // Predicated region
      $region29: #{graph_reconstruction_head.1} parent=11 // pred_check
        %p250 = pneg %p171
      $region30: #{graph_reconstruction_head.1} parent=11 // pred_check_branch
        %252 = sbr.rel (%p250) target = $region32
      $region31: #{graph_reconstruction_head.1} parent=11 // pred_region
        _
      $region32: #{graph_reconstruction_head.1} parent=11 // pred_fallthru
        _
    $region12: #{graph_reconstruction_head.1} parent=5 // pred_fallthru
      _
    %p253 = scmp.lt.s32.totalorder %s14, 4
    // Predicated region
    $region33: #{graph_reconstruction_head.1} parent=5 // pred_check
      %p254 = pneg %p253
    $region34: #{graph_reconstruction_head.1} parent=5 // pred_check_branch
      %256 = sbr.rel (%p254) target = $region36
    $region35: #{graph_reconstruction_head.1} parent=5 // pred_region
      // Predicated region
      $region37: #{graph_reconstruction_head.1} parent=35 // pred_check
        %p257 = pneg %p34
      $region38: #{graph_reconstruction_head.1} parent=35 // pred_check_branch
        %259 = sbr.rel (%p257) target = $region40
      $region39: #{graph_reconstruction_head.1} parent=35 // pred_region
        %s260 = smul.u32 4, %s14
        %p261 = scmp.lt.s32.totalorder %s260, 15
        %s262 = scalar_select %p261, %s260, 15
        %s263 = smul.addr %s262, 2
        %s264 = scalar_lea.vmem %s0, %s263
        %s265 = smul.u32 4, %s14
      $region40: #{graph_reconstruction_head.1} parent=35 // pred_fallthru
        _
      // Predicated region
      $region41: #{graph_reconstruction_head.1} parent=35 // pred_check
        %p266 = pneg %p81
      $region42: #{graph_reconstruction_head.1} parent=35 // pred_check_branch
        %268 = sbr.rel (%p266) target = $region44
      $region43: #{graph_reconstruction_head.1} parent=35 // pred_region
        %s269 = smul.u32 4, %s14
        %p270 = scmp.lt.s32.totalorder %s269, 15
        %s271 = scalar_select %p270, %s269, 15
        %s272 = smul.addr %s271, 8
        %s273 = scalar_lea.vmem %s2, %s272
        %s274 = smul.u32 4, %s14
      $region44: #{graph_reconstruction_head.1} parent=35 // pred_fallthru
        _
      // Predicated region
      $region45: #{graph_reconstruction_head.1} parent=35 // pred_check
        %p275 = pneg %p191
      $region46: #{graph_reconstruction_head.1} parent=35 // pred_check_branch
        %277 = sbr.rel (%p275) target = $region48
      $region47: #{graph_reconstruction_head.1} parent=35 // pred_region
        %s278 = smul.u32 4, %s14
        %p279 = scmp.lt.s32.totalorder %s278, 15
        %s280 = scalar_select %p279, %s278, 15
        %s281 = smul.addr %s280, 8
        %s282 = scalar_lea.vmem %s7, %s281
        %s283 = smul.u32 4, %s14
      $region48: #{graph_reconstruction_head.1} parent=35 // pred_fallthru
        _
    $region36: #{graph_reconstruction_head.1} parent=5 // pred_fallthru
      _
    %p284 = scmp.le.s32.totalorder 1, %s14
    %p285 = scmp.lt.s32.totalorder %s14, 5
    %p286 = pnand %p284, %p285
    %p287 = pneg %p286
    // Predicated region
    $region49: #{graph_reconstruction_head.1} parent=5 // pred_check
      _
    $region50: #{graph_reconstruction_head.1} parent=5 // pred_check_branch
      %289 = sbr.rel (%p286) target = $region52
    $region51: #{graph_reconstruction_head.1} parent=5 // pred_region
      %s290 = ssub.s32 %s14, 1
      %s291 = smul.u32 4, %s19
      %p292 = scmp.lt.s32.totalorder %s291, 15
      %s293 = scalar_select %p292, %s291, 15
      %s294 = smul.addr %s293, 2
      %s295 = scalar_lea.vmem %s0, %s294
      %p296 = pneg %p40
      %p297 = pneg %p37
      %p298 = pneg %p61
      %p299 = pneg %p58
      %s300 = smul.u32 4, %s19
      %p301 = scmp.lt.s32.totalorder %s300, 15
      %s302 = scalar_select %p301, %s300, 15
      %s303 = smul.addr %s302, 8
      %s304 = scalar_lea.vmem %s2, %s303
      %p305 = pneg %p87
      %p306 = pneg %p84
      %p307 = pneg %p108
      %p308 = pneg %p105
      %p309 = pneg %p129
      %p310 = pneg %p126
      %p311 = pneg %p150
      %p312 = pneg %p147
      %p313 = pneg %p171
      %p314 = pneg %p168
      %s315 = smul.u32 4, %s19
      %p316 = scmp.lt.s32.totalorder %s315, 15
      %s317 = scalar_select %p316, %s315, 15
      %s318 = smul.addr %s317, 8
      %s319 = scalar_lea.vmem %s7, %s318
      %p320 = pneg %p197
      %p321 = pneg %p194
      %p322 = pneg %p223
      %p323 = pneg %p220
      %p324 = scmp.lt.s32.totalorder %s19, 3
      %s325 = scalar_select %p324, %s19, 3
      %s326 = smul.addr %s325, 8
      %s327 = scalar_lea.vmem %s8, %s326
      %s328 = smul.u32 4, %s19
      %p329 = scmp.lt.s32.totalorder %s328, 15
      %s330 = scalar_select %p329, %s328, 15
      %s331 = smul.addr %s330, 2
      %s332 = scalar_lea.vmem %s0, %s331
      %s333 = smul.u32 4, %s19
      %s334 = smul.u32 4, %s19
      %p335 = scmp.lt.s32.totalorder %s334, 15
      %s336 = scalar_select %p335, %s334, 15
      %s337 = smul.addr %s336, 8
      %s338 = scalar_lea.vmem %s2, %s337
      %s339 = smul.u32 4, %s19
      %s340 = smul.u32 4, %s19
      %p341 = scmp.lt.s32.totalorder %s340, 15
      %s342 = scalar_select %p341, %s340, 15
      %s343 = smul.addr %s342, 8
      %s344 = scalar_lea.vmem %s7, %s343
      %s345 = smul.u32 4, %s19
      %p346 = scmp.lt.s32.totalorder %s19, 3
      %s347 = scalar_select %p346, %s19, 3
      %s348 = smul.addr %s347, 8
      %s349 = scalar_lea.vmem %s8, %s348
      %v351 = vld [vmem:[%s332] sm:$0x3]
      %v352 = vld [vmem:[%s332 + $0x2] sm:$0x3]
      %v353 = vld [vmem:[%s332 + $0x4] sm:$0x3]
      %v354 = vld [vmem:[%s332 + $0x6] sm:$0x3]
      %v355 = vunpack.c.l.s8.bf16 %v351
      %v356 = vunpack.c.l.s8.bf16 %v352
      %v357 = vunpack.c.l.s8.bf16 %v353
      %v358 = vunpack.c.l.s8.bf16 %v354
      %v359 = vld [vmem:[%s1] sm:$0xf]
      %v360 = vld [vmem:[%s1 + $0x4] sm:$0xf]
      %v361 = vld [vmem:[%s1 + $0x8] sm:$0xf]
      %v362 = vld [vmem:[%s1 + $0xc] sm:$0xf]
      %v363 = vld [vmem:[%s1 + $0x10] sm:$0xf]
      %v364 = vld [vmem:[%s1 + $0x14] sm:$0xf]
      %v365 = vld [vmem:[%s1 + $0x18] sm:$0xf]
      %v366 = vld [vmem:[%s1 + $0x1c] sm:$0xf]
      %v367 = vld [vmem:[%s1 + $0x20] sm:$0xf]
      %v368 = vld [vmem:[%s1 + $0x24] sm:$0xf]
      %v369 = vld [vmem:[%s1 + $0x28] sm:$0xf]
      %v370 = vld [vmem:[%s1 + $0x2c] sm:$0xf]
      %v371 = vld [vmem:[%s1 + $0x30] sm:$0xf]
      %v372 = vld [vmem:[%s1 + $0x34] sm:$0xf]
      %v373 = vld [vmem:[%s1 + $0x38] sm:$0xf]
      %v374 = vld [vmem:[%s1 + $0x3c] sm:$0xf]
      %v375 = vld [vmem:[%s338] sm:$0xff]
      %v376 = vld [vmem:[%s338 + $0x8] sm:$0xff]
      %v377 = vld [vmem:[%s338 + $0x10] sm:$0xff]
      %v378 = vld [vmem:[%s338 + $0x18] sm:$0xff]
      %v379 = vld [vmem:[%s3] sm:$0xff]
      %v380 = vld [vmem:[%s3 + $0x8] sm:$0xf]
      %vm381 = vcmask 97280
      %v383 = vsel %vm381, %v375, 0
      %v386 = vsel %vm381, %v376, 0
      %v389 = vsel %vm381, %v377, 0
      %v392 = vsel %vm381, %v378, 0
      %vm394 = vcmask 1043456
      %v396 = vsel %vm394, %v380, 0
      %398 = vmatprep.subr.mxu0 0.0
      %399 = vmatpush1.msra.mxu0 %v379
      %400 = vmatprep.subr.mxu0 0.0
      %401 = vmatpush1.msra.mxu0 %v396
      %402 = vmatprep.subr.mxu0 0.0
      %403 = vmatpush1.msra.mxu0 0.0
      %404 = vmatprep.subr.mxu0 0.0
      %405 = vmatpush1.msra.mxu0 0.0
      %406 = vmatprep.subr.mxu0 0.0
      %407 = vmatpush1.msra.mxu0 0.0
      %408 = vmatprep.subr.mxu0 0.0
      %409 = vmatpush1.msra.mxu0 0.0
      %410 = vmatprep.subr.mxu0 0.0
      %411 = vmatpush1.msra.mxu0 0.0
      %412 = vmatprep.subr.mxu0 0.0
      %413 = vmatpush1.msra.mxu0 0.0
      %414 = vmatprep.subr.mxu0 0.0
      %415 = vmatpush1.msra.mxu0 0.0
      %416 = vmatprep.subr.mxu0 0.0
      %417 = vmatpush1.msra.mxu0 0.0
      %418 = vmatprep.subr.mxu0 0.0
      %419 = vmatpush1.msra.mxu0 0.0
      %420 = vmatprep.subr.mxu0 0.0
      %421 = vmatpush1.msra.mxu0 0.0
      %422 = vmatprep.subr.mxu0 0.0
      %423 = vmatpush1.msra.mxu0 0.0
      %424 = vmatprep.subr.mxu0 0.0
      %425 = vmatpush1.msra.mxu0 0.0
      %426 = vmatprep.subr.mxu0 0.0
      %427 = vmatpush1.msra.mxu0 0.0
      %428 = vmatprep.subr.mxu0 0.0
      %429 = vmatpush1.msra.mxu0 0.0
      %430 = vmatprep.subr.mxu0 0.0
      %431 = vmatpush1.msra.mxu0 0.0
      %432 = vmatprep.subr.mxu0 0.0
      %433 = vmatpush1.msra.mxu0 0.0
      %434 = vmatprep.subr.mxu0 0.0
      %435 = vmatpush1.msra.mxu0 0.0
      %436 = vmatprep.subr.mxu0 0.0
      %437 = vmatpush1.msra.mxu0 0.0
      %438 = vmatprep.subr.mxu0 0.0
      %439 = vmatpush1.msra.mxu0 0.0
      %440 = vmatprep.subr.mxu0 0.0
      %441 = vmatpush1.msra.mxu0 0.0
      %442 = vmatprep.subr.mxu0 0.0
      %443 = vmatpush1.msra.mxu0 0.0
      %444 = vmatprep.subr.mxu0 0.0
      %445 = vmatpush1.msra.mxu0 0.0
      %446 = vmatprep.subr.mxu0 0.0
      %447 = vmatpush1.msra.mxu0 0.0
      %448 = vmatprep.subr.mxu0 0.0
      %449 = vmatpush1.msra.mxu0 0.0
      %450 = vmatprep.subr.mxu0 0.0
      %451 = vmatpush1.msra.mxu0 0.0
      %452 = vmatprep.subr.mxu0 0.0
      %453 = vmatpush1.msra.mxu0 0.0
      %454 = vmatprep.subr.mxu0 0.0
      %455 = vmatpush1.msra.mxu0 0.0
      %456 = vmatprep.subr.mxu0 0.0
      %457 = vmatpush1.msra.mxu0 0.0
      %458 = vmatprep.subr.mxu0 0.0
      %459 = vmatpush1.msra.mxu0 0.0
      %460 = vmatprep.subr.mxu0 0.0
      %461 = vmatpush1.msra.mxu0 0.0
      %462 = vmatprep.mubr.f32.mxu0 0.0
      %463 = vmatmul.mubr.f32.gmra.mrb[0].mxu0 %v383
      %v464 = vpop.f32.mrb[0].mxu0
      %v465 = vadd.f32 0.0, %v464
      %v466 = vpop.f32.mrb[0].mxu0
      %467 = vmatprep.mubr.f32.mxu0 0.0
      %468 = vmatmul.mubr.f32.gmra.mrb[0].mxu0 %v386
      %v469 = vpop.f32.mrb[0].mxu0
      %v470 = vadd.f32 0.0, %v469
      %v471 = vpop.f32.mrb[0].mxu0
      %472 = vmatprep.mubr.f32.mxu0 0.0
      %473 = vmatmul.mubr.f32.gmra.mrb[0].mxu0 %v389
      %v474 = vpop.f32.mrb[0].mxu0
      %v475 = vadd.f32 0.0, %v474
      %v476 = vpop.f32.mrb[0].mxu0
      %477 = vmatprep.mubr.f32.mxu0 0.0
      %478 = vmatmul.mubr.f32.gmra.mrb[0].mxu0 %v392
      %v479 = vpop.f32.mrb[0].mxu0
      %v480 = vadd.f32 0.0, %v479
      %v481 = vpop.f32.mrb[0].mxu0
      %482 = vdwg.mxu0
      %v487 = vunpack.c.l.b16 %v355
      %v488 = vunpack.c.l.b16 %v356
      %v489 = vunpack.c.l.b16 %v357
      %v490 = vunpack.c.l.b16 %v358
      %v491 = vpack.c.b16 %v488, %v487
      %v492 = vpack.c.b16 %v490, %v489
      %v511 = vunpack.c.l.b16 %v359
      %v512 = vunpack.c.l.b16 %v360
      %v513 = vunpack.c.l.b16 %v361
      %v514 = vunpack.c.l.b16 %v362
      %v515 = vunpack.c.l.b16 %v363
      %v516 = vunpack.c.l.b16 %v364
      %v517 = vunpack.c.l.b16 %v365
      %v518 = vunpack.c.l.b16 %v366
      %v519 = vunpack.c.l.b16 %v367
      %v520 = vunpack.c.l.b16 %v368
      %v521 = vunpack.c.l.b16 %v369
      %v522 = vunpack.c.l.b16 %v370
      %v523 = vunpack.c.l.b16 %v371
      %v524 = vunpack.c.l.b16 %v372
      %v525 = vunpack.c.l.b16 %v373
      %v526 = vunpack.c.l.b16 %v374
      %v527 = vpack.c.b16 %v512, %v511
      %v528 = vpack.c.b16 %v514, %v513
      %v529 = vpack.c.b16 %v516, %v515
      %v530 = vpack.c.b16 %v518, %v517
      %v531 = vpack.c.b16 %v520, %v519
      %v532 = vpack.c.b16 %v522, %v521
      %v533 = vpack.c.b16 %v524, %v523
      %v534 = vpack.c.b16 %v526, %v525
      %543 = vmatprep.subr.bf16.mxu0 0
      %544 = vmatpush1.bf16.msra.mxu0 %v527
      %545 = vmatprep.subr.bf16.mxu0 0
      %546 = vmatpush1.bf16.msra.mxu0 %v528
      %547 = vmatprep.subr.bf16.mxu0 0
      %548 = vmatpush1.bf16.msra.mxu0 %v529
      %549 = vmatprep.subr.bf16.mxu0 0
      %550 = vmatpush1.bf16.msra.mxu0 %v530
      %551 = vmatprep.subr.bf16.mxu0 0
      %552 = vmatpush1.bf16.msra.mxu0 %v531
      %553 = vmatprep.subr.bf16.mxu0 0
      %554 = vmatpush1.bf16.msra.mxu0 %v532
      %555 = vmatprep.subr.bf16.mxu0 0
      %556 = vmatpush1.bf16.msra.mxu0 %v533
      %557 = vmatprep.subr.bf16.mxu0 0
      %558 = vmatpush1.bf16.msra.mxu0 %v534
      %559 = vmatprep.subr.bf16.mxu0 0
      %560 = vmatpush1.bf16.msra.mxu0 0
      %561 = vmatprep.subr.bf16.mxu0 0
      %562 = vmatpush1.bf16.msra.mxu0 0
      %563 = vmatprep.subr.bf16.mxu0 0
      %564 = vmatpush1.bf16.msra.mxu0 0
      %565 = vmatprep.subr.bf16.mxu0 0
      %566 = vmatpush1.bf16.msra.mxu0 0
      %567 = vmatprep.subr.bf16.mxu0 0
      %568 = vmatpush1.bf16.msra.mxu0 0
      %569 = vmatprep.subr.bf16.mxu0 0
      %570 = vmatpush1.bf16.msra.mxu0 0
      %571 = vmatprep.subr.bf16.mxu0 0
      %572 = vmatpush1.bf16.msra.mxu0 0
      %573 = vmatprep.subr.bf16.mxu0 0
      %574 = vmatpush1.bf16.msra.mxu0 0
      %575 = vmatprep.mubr.bf16.mxu0 0
      %576 = vmatmul.mubr.bf16.gmra.mrb[0].mxu0 %v491
      %v577 = vpop.f32.mrb[0].mxu0
      %v578 = vadd.f32 %v465, %v577
      %v579 = vpop.f32.mrb[0].mxu0
      %v580 = vpop.f32.mrb[0].mxu0
      %v581 = vadd.f32 %v470, %v580
      %v582 = vpop.f32.mrb[0].mxu0
      %583 = vmatprep.mubr.bf16.mxu0 0
      %584 = vmatmul.mubr.bf16.gmra.mrb[0].mxu0 %v492
      %v585 = vpop.f32.mrb[0].mxu0
      %v586 = vadd.f32 %v475, %v585
      %v587 = vpop.f32.mrb[0].mxu0
      %v588 = vpop.f32.mrb[0].mxu0
      %v589 = vadd.f32 %v480, %v588
      %v590 = vpop.f32.mrb[0].mxu0
      %591 = vdwg.mxu0
      %v592 = vld [vmem:[%s4] sm:$0x1]
      %v594 = vlaneseq
      %v595 = vshrl.u32 %v594, 7
      %v596 = vsub.s32 0, %v595
      %v597 = vrot.slane %v592, %v596
      %v599 = vadd.f32 %v578, %v597
      %v600 = vadd.f32 %v581, %v597
      %v601 = vadd.f32 %v586, %v597
      %v602 = vadd.f32 %v589, %v597
      %v603 = vmax.f32 %v599, 0.0
      %v604 = vmax.f32 %v600, 0.0
      %v605 = vmax.f32 %v601, 0.0
      %v606 = vmax.f32 %v602, 0.0
      %v607 = vld [vmem:[%s5] sm:$0xff]
      %v608 = vld [vmem:[%s5 + $0x8] sm:$0xff]
      %v609 = vld [vmem:[%s5 + $0x10] sm:$0xff]
      %v610 = vld [vmem:[%s5 + $0x18] sm:$0xff]
      %v611 = vld [vmem:[%s5 + $0x20] sm:$0xff]
      %v612 = vld [vmem:[%s5 + $0x28] sm:$0xff]
      %v613 = vld [vmem:[%s5 + $0x30] sm:$0xff]
      %v614 = vld [vmem:[%s5 + $0x38] sm:$0xff]
      %v615 = vld [vmem:[%s5 + $0x40] sm:$0xff]
      %v616 = vld [vmem:[%s5 + $0x48] sm:$0xff]
      %v617 = vld [vmem:[%s5 + $0x50] sm:$0xff]
      %v618 = vld [vmem:[%s5 + $0x58] sm:$0xff]
      %v619 = vld [vmem:[%s5 + $0x60] sm:$0xff]
      %v620 = vld [vmem:[%s5 + $0x68] sm:$0xff]
      %v621 = vld [vmem:[%s5 + $0x70] sm:$0xff]
      %v622 = vld [vmem:[%s5 + $0x78] sm:$0xff]
      %v623 = vld [vmem:[%s6] sm:$0x1]
      %v625 = vlaneseq
      %v626 = vshrl.u32 %v625, 7
      %v627 = vsub.s32 0, %v626
      %v628 = vrot.slane %v623, %v627
      %630 = vmatprep.subr.mxu0 0.0
      %631 = vmatpush1.msra.mxu0 %v607
      %632 = vmatprep.subr.mxu0 0.0
      %633 = vmatpush1.msra.mxu0 %v608
      %634 = vmatprep.subr.mxu0 0.0
      %635 = vmatpush1.msra.mxu0 %v609
      %636 = vmatprep.subr.mxu0 0.0
      %637 = vmatpush1.msra.mxu0 %v610
      %638 = vmatprep.subr.mxu0 0.0
      %639 = vmatpush1.msra.mxu0 %v611
      %640 = vmatprep.subr.mxu0 0.0
      %641 = vmatpush1.msra.mxu0 %v612
      %642 = vmatprep.subr.mxu0 0.0
      %643 = vmatpush1.msra.mxu0 %v613
      %644 = vmatprep.subr.mxu0 0.0
      %645 = vmatpush1.msra.mxu0 %v614
      %646 = vmatprep.subr.mxu0 0.0
      %647 = vmatpush1.msra.mxu0 %v615
      %648 = vmatprep.subr.mxu0 0.0
      %649 = vmatpush1.msra.mxu0 %v616
      %650 = vmatprep.subr.mxu0 0.0
      %651 = vmatpush1.msra.mxu0 %v617
      %652 = vmatprep.subr.mxu0 0.0
      %653 = vmatpush1.msra.mxu0 %v618
      %654 = vmatprep.subr.mxu0 0.0
      %655 = vmatpush1.msra.mxu0 %v619
      %656 = vmatprep.subr.mxu0 0.0
      %657 = vmatpush1.msra.mxu0 %v620
      %658 = vmatprep.subr.mxu0 0.0
      %659 = vmatpush1.msra.mxu0 %v621
      %660 = vmatprep.subr.mxu0 0.0
      %661 = vmatpush1.msra.mxu0 %v622
      %662 = vmatprep.subr.mxu0 0.0
      %663 = vmatpush1.msra.mxu0 0.0
      %664 = vmatprep.subr.mxu0 0.0
      %665 = vmatpush1.msra.mxu0 0.0
      %666 = vmatprep.subr.mxu0 0.0
      %667 = vmatpush1.msra.mxu0 0.0
      %668 = vmatprep.subr.mxu0 0.0
      %669 = vmatpush1.msra.mxu0 0.0
      %670 = vmatprep.subr.mxu0 0.0
      %671 = vmatpush1.msra.mxu0 0.0
      %672 = vmatprep.subr.mxu0 0.0
      %673 = vmatpush1.msra.mxu0 0.0
      %674 = vmatprep.subr.mxu0 0.0
      %675 = vmatpush1.msra.mxu0 0.0
      %676 = vmatprep.subr.mxu0 0.0
      %677 = vmatpush1.msra.mxu0 0.0
      %678 = vmatprep.subr.mxu0 0.0
      %679 = vmatpush1.msra.mxu0 0.0
      %680 = vmatprep.subr.mxu0 0.0
      %681 = vmatpush1.msra.mxu0 0.0
      %682 = vmatprep.subr.mxu0 0.0
      %683 = vmatpush1.msra.mxu0 0.0
      %684 = vmatprep.subr.mxu0 0.0
      %685 = vmatpush1.msra.mxu0 0.0
      %686 = vmatprep.subr.mxu0 0.0
      %687 = vmatpush1.msra.mxu0 0.0
      %688 = vmatprep.subr.mxu0 0.0
      %689 = vmatpush1.msra.mxu0 0.0
      %690 = vmatprep.subr.mxu0 0.0
      %691 = vmatpush1.msra.mxu0 0.0
      %692 = vmatprep.subr.mxu0 0.0
      %693 = vmatpush1.msra.mxu0 0.0
      %694 = vmatprep.mubr.f32.mxu0 0.0
      %695 = vmatmul.mubr.f32.gmra.mrb[0].mxu0 %v603
      %v696 = vpop.f32.mrb[0].mxu0
      %v697 = vadd.f32 %v628, %v696
      %v698 = vpop.f32.mrb[0].mxu0
      %699 = vmatprep.mubr.f32.mxu0 0.0
      %700 = vmatmul.mubr.f32.gmra.mrb[0].mxu0 %v604
      %v701 = vpop.f32.mrb[0].mxu0
      %v702 = vadd.f32 %v628, %v701
      %v703 = vpop.f32.mrb[0].mxu0
      %704 = vmatprep.mubr.f32.mxu0 0.0
      %705 = vmatmul.mubr.f32.gmra.mrb[0].mxu0 %v605
      %v706 = vpop.f32.mrb[0].mxu0
      %v707 = vadd.f32 %v628, %v706
      %v708 = vpop.f32.mrb[0].mxu0
      %709 = vmatprep.mubr.f32.mxu0 0.0
      %710 = vmatmul.mubr.f32.gmra.mrb[0].mxu0 %v606
      %v711 = vpop.f32.mrb[0].mxu0
      %v712 = vadd.f32 %v628, %v711
      %v713 = vpop.f32.mrb[0].mxu0
      %714 = vdwg.mxu0
      %v715 = vlaneseq
      %v716 = vand.u32 %v715, 127
      %v717 = vld [vmem:[%s344] sm:$0xff]
      %v718 = vld [vmem:[%s344 + $0x8] sm:$0xff]
      %v719 = vld [vmem:[%s344 + $0x10] sm:$0xff]
      %v720 = vld [vmem:[%s344 + $0x18] sm:$0xff]
      %v721 = vlaneseq
      %v722 = vshrl.u32 %v721, 7
      %v723 = vadd.s32 %v722, 8
      %v724 = vadd.s32 %v722, 16
      %v725 = vadd.s32 %v722, 24
      %s726 = smul.u32 %s19, 32
      %v727 = vstv %s726
      %v728 = vadd.s32 %v727, %v722
      %v729 = vadd.s32 %v727, %v723
      %v730 = vadd.s32 %v727, %v724
      %v731 = vadd.s32 %v727, %v725
      %vm732 = vcmp.lt.s32.totalorder %v728, 100
      %vm733 = vcmp.lt.s32.totalorder %v729, 100
      %vm734 = vcmp.lt.s32.totalorder %v730, 100
      %vm735 = vcmp.lt.s32.totalorder %v731, 100
      %v736 = vsel %vm732, 1, 0
      %v737 = vsel %vm733, 1, 0
      %v738 = vsel %vm734, 1, 0
      %v739 = vsel %vm735, 1, 0
      %v740 = vcvt.s32.f32 %v736
      %v741 = vcvt.s32.f32 %v737
      %v742 = vcvt.s32.f32 %v738
      %v743 = vcvt.s32.f32 %v739
      %vm744 = vcmp.lt.s32.totalorder %v716, 119
      %v745 = vsel %vm744, %v697, -1e+30
      %v746 = vsel %vm744, %v702, -1e+30
      %v747 = vsel %vm744, %v707, -1e+30
      %v748 = vsel %vm744, %v712, -1e+30
      %749 = vmax.xlane.f32.xlu0 %v745
      %v750 = vpop.xlane.xlu0 %749
      %751 = vmax.xlane.f32.xlu0 %v746
      %v752 = vpop.xlane.xlu0 %751
      %753 = vmax.xlane.f32.xlu0 %v747
      %v754 = vpop.xlane.xlu0 %753
      %755 = vmax.xlane.f32.xlu0 %v748
      %v756 = vpop.xlane.xlu0 %755
      %v757 = vsub.f32 %v745, %v750
      %v758 = vsub.f32 %v746, %v752
      %v759 = vsub.f32 %v747, %v754
      %v760 = vsub.f32 %v748, %v756
      %v761 = vmul.f32 %v757, 1.442695
      %v762 = vpow.pop %v761
      %v763 = vmul.f32 %v758, 1.442695
      %v764 = vpow.pop %v763
      %v765 = vmul.f32 %v759, 1.442695
      %v766 = vpow.pop %v765
      %v767 = vmul.f32 %v760, 1.442695
      %v768 = vpow.pop %v767
      %769 = vadd.xlane.f32.xlu0 %v762
      %v770 = vpop.xlane.xlu0 %769
      %771 = vadd.xlane.f32.xlu0 %v764
      %v772 = vpop.xlane.xlu0 %771
      %773 = vadd.xlane.f32.xlu0 %v766
      %v774 = vpop.xlane.xlu0 %773
      %775 = vadd.xlane.f32.xlu0 %v768
      %v776 = vpop.xlane.xlu0 %775
      %v777 = vlog2.pop %v770
      %v778 = vmul.f32 %v777, 0.6931472
      %v779 = vlog2.pop %v772
      %v780 = vmul.f32 %v779, 0.6931472
      %v781 = vlog2.pop %v774
      %v782 = vmul.f32 %v781, 0.6931472
      %v783 = vlog2.pop %v776
      %v784 = vmul.f32 %v783, 0.6931472
      %v785 = vadd.f32 %v750, %v778
      %v786 = vadd.f32 %v752, %v780
      %v787 = vadd.f32 %v754, %v782
      %v788 = vadd.f32 %v756, %v784
      %789 = vset.pattern.permute.xlu0 0
      %790 = vperm.xlu0 %789, %v717
      %v791 = vpop.permute.xlu0 %790
      %792 = vset.pattern.permute.xlu0 0
      %793 = vperm.xlu0 %792, %v718
      %v794 = vpop.permute.xlu0 %793
      %795 = vset.pattern.permute.xlu0 0
      %796 = vperm.xlu0 %795, %v719
      %v797 = vpop.permute.xlu0 %796
      %798 = vset.pattern.permute.xlu0 0
      %799 = vperm.xlu0 %798, %v720
      %v800 = vpop.permute.xlu0 %799
      %vm801 = vcmp.eq.s32.totalorder %v716, %v791
      %vm802 = vcmp.eq.s32.totalorder %v716, %v794
      %vm803 = vcmp.eq.s32.totalorder %v716, %v797
      %vm804 = vcmp.eq.s32.totalorder %v716, %v800
      %v805 = vsel %vm801, %v697, 0.0
      %v806 = vsel %vm802, %v702, 0.0
      %v807 = vsel %vm803, %v707, 0.0
      %v808 = vsel %vm804, %v712, 0.0
      %809 = vadd.xlane.f32.xlu0 %v805
      %v810 = vpop.xlane.xlu0 %809
      %811 = vadd.xlane.f32.xlu0 %v806
      %v812 = vpop.xlane.xlu0 %811
      %813 = vadd.xlane.f32.xlu0 %v807
      %v814 = vpop.xlane.xlu0 %813
      %815 = vadd.xlane.f32.xlu0 %v808
      %v816 = vpop.xlane.xlu0 %815
      %vm817 = vcmp.eq.f32.partialorder %v745, %v750
      %vm818 = vcmp.eq.f32.partialorder %v746, %v752
      %vm819 = vcmp.eq.f32.partialorder %v747, %v754
      %vm820 = vcmp.eq.f32.partialorder %v748, %v756
      %v821 = vsel %vm817, %v716, 128
      %v822 = vsel %vm818, %v716, 128
      %v823 = vsel %vm819, %v716, 128
      %v824 = vsel %vm820, %v716, 128
      %v825 = vand.u32 %v821, 65535
      %v826 = vshra.s32 %v821, 16
      %v827 = vcvt.s32.f32 %v825
      %v828 = vcvt.s32.f32 %v826
      %829 = vmin.xlane.f32.xlu0 %v828
      %v830 = vpop.xlane.xlu0 %829
      %vm831 = vcmp.eq.f32.partialorder %v828, %v830
      %v832 = vsel %vm831, %v827, inf
      %833 = vmin.xlane.f32.xlu0 %v832
      %v834 = vpop.xlane.xlu0 %833
      %v835 = vcvt.f32.s32 %v834
      %v836 = vcvt.f32.s32 %v830
      %v837 = vshll.u32 %v836, 16
      %v838 = vadd.s32 %v837, %v835
      %v839 = vand.u32 %v822, 65535
      %v840 = vshra.s32 %v822, 16
      %v841 = vcvt.s32.f32 %v839
      %v842 = vcvt.s32.f32 %v840
      %843 = vmin.xlane.f32.xlu0 %v842
      %v844 = vpop.xlane.xlu0 %843
      %vm845 = vcmp.eq.f32.partialorder %v842, %v844
      %v846 = vsel %vm845, %v841, inf
      %847 = vmin.xlane.f32.xlu0 %v846
      %v848 = vpop.xlane.xlu0 %847
      %v849 = vcvt.f32.s32 %v848
      %v850 = vcvt.f32.s32 %v844
      %v851 = vshll.u32 %v850, 16
      %v852 = vadd.s32 %v851, %v849
      %v853 = vand.u32 %v823, 65535
      %v854 = vshra.s32 %v823, 16
      %v855 = vcvt.s32.f32 %v853
      %v856 = vcvt.s32.f32 %v854
      %857 = vmin.xlane.f32.xlu0 %v856
      %v858 = vpop.xlane.xlu0 %857
      %vm859 = vcmp.eq.f32.partialorder %v856, %v858
      %v860 = vsel %vm859, %v855, inf
      %861 = vmin.xlane.f32.xlu0 %v860
      %v862 = vpop.xlane.xlu0 %861
      %v863 = vcvt.f32.s32 %v862
      %v864 = vcvt.f32.s32 %v858
      %v865 = vshll.u32 %v864, 16
      %v866 = vadd.s32 %v865, %v863
      %v867 = vand.u32 %v824, 65535
      %v868 = vshra.s32 %v824, 16
      %v869 = vcvt.s32.f32 %v867
      %v870 = vcvt.s32.f32 %v868
      %871 = vmin.xlane.f32.xlu0 %v870
      %v872 = vpop.xlane.xlu0 %871
      %vm873 = vcmp.eq.f32.partialorder %v870, %v872
      %v874 = vsel %vm873, %v869, inf
      %875 = vmin.xlane.f32.xlu0 %v874
      %v876 = vpop.xlane.xlu0 %875
      %v877 = vcvt.f32.s32 %v876
      %v878 = vcvt.f32.s32 %v872
      %v879 = vshll.u32 %v878, 16
      %v880 = vadd.s32 %v879, %v877
      %vm881 = vcmp.eq.s32.totalorder %v838, %v717
      %vm882 = vcmp.eq.s32.totalorder %v852, %v718
      %vm883 = vcmp.eq.s32.totalorder %v866, %v719
      %vm884 = vcmp.eq.s32.totalorder %v880, %v720
      %v885 = vsel %vm881, 1, 0
      %v886 = vsel %vm882, 1, 0
      %v887 = vsel %vm883, 1, 0
      %v888 = vsel %vm884, 1, 0
      %v889 = vcvt.s32.f32 %v885
      %v890 = vcvt.s32.f32 %v886
      %v891 = vcvt.s32.f32 %v887
      %v892 = vcvt.s32.f32 %v888
      %vm893 = vcmp.ge.s32.totalorder %v716, 119
      %vm894 = vcmp.lt.s32.totalorder %v716, 123
      %vm895 = vmand %vm893, %vm894
      %v896 = vsel %vm895, %v697, -1e+30
      %v897 = vsel %vm895, %v702, -1e+30
      %v898 = vsel %vm895, %v707, -1e+30
      %v899 = vsel %vm895, %v712, -1e+30
      %900 = vmax.xlane.f32.xlu0 %v896
      %v901 = vpop.xlane.xlu0 %900
      %902 = vmax.xlane.f32.xlu0 %v897
      %v903 = vpop.xlane.xlu0 %902
      %904 = vmax.xlane.f32.xlu0 %v898
      %v905 = vpop.xlane.xlu0 %904
      %906 = vmax.xlane.f32.xlu0 %v899
      %v907 = vpop.xlane.xlu0 %906
      %v908 = vsub.f32 %v896, %v901
      %v909 = vsub.f32 %v897, %v903
      %v910 = vsub.f32 %v898, %v905
      %v911 = vsub.f32 %v899, %v907
      %v912 = vmul.f32 %v908, 1.442695
      %v913 = vpow.pop %v912
      %v914 = vmul.f32 %v909, 1.442695
      %v915 = vpow.pop %v914
      %v916 = vmul.f32 %v910, 1.442695
      %v917 = vpow.pop %v916
      %v918 = vmul.f32 %v911, 1.442695
      %v919 = vpow.pop %v918
      %920 = vadd.xlane.f32.xlu0 %v913
      %v921 = vpop.xlane.xlu0 %920
      %922 = vadd.xlane.f32.xlu0 %v915
      %v923 = vpop.xlane.xlu0 %922
      %924 = vadd.xlane.f32.xlu0 %v917
      %v925 = vpop.xlane.xlu0 %924
      %926 = vadd.xlane.f32.xlu0 %v919
      %v927 = vpop.xlane.xlu0 %926
      %v928 = vlog2.pop %v921
      %v929 = vmul.f32 %v928, 0.6931472
      %v930 = vlog2.pop %v923
      %v931 = vmul.f32 %v930, 0.6931472
      %v932 = vlog2.pop %v925
      %v933 = vmul.f32 %v932, 0.6931472
      %v934 = vlog2.pop %v927
      %v935 = vmul.f32 %v934, 0.6931472
      %v936 = vadd.f32 %v901, %v929
      %v937 = vadd.f32 %v903, %v931
      %v938 = vadd.f32 %v905, %v933
      %v939 = vadd.f32 %v907, %v935
      %v940 = vadd.s32 %v717, 119
      %v941 = vadd.s32 %v718, 119
      %v942 = vadd.s32 %v719, 119
      %v943 = vadd.s32 %v720, 119
      %944 = vset.pattern.permute.xlu0 1
      %945 = vperm.xlu0 %944, %v940
      %v946 = vpop.permute.xlu0 %945
      %947 = vset.pattern.permute.xlu0 1
      %948 = vperm.xlu0 %947, %v941
      %v949 = vpop.permute.xlu0 %948
      %950 = vset.pattern.permute.xlu0 1
      %951 = vperm.xlu0 %950, %v942
      %v952 = vpop.permute.xlu0 %951
      %953 = vset.pattern.permute.xlu0 1
      %954 = vperm.xlu0 %953, %v943
      %v955 = vpop.permute.xlu0 %954
      %vm956 = vcmp.eq.s32.totalorder %v716, %v946
      %vm957 = vcmp.eq.s32.totalorder %v716, %v949
      %vm958 = vcmp.eq.s32.totalorder %v716, %v952
      %vm959 = vcmp.eq.s32.totalorder %v716, %v955
      %v960 = vsel %vm956, %v697, 0.0
      %v961 = vsel %vm957, %v702, 0.0
      %v962 = vsel %vm958, %v707, 0.0
      %v963 = vsel %vm959, %v712, 0.0
      %964 = vadd.xlane.f32.xlu0 %v960
      %v965 = vpop.xlane.xlu0 %964
      %966 = vadd.xlane.f32.xlu0 %v961
      %v967 = vpop.xlane.xlu0 %966
      %968 = vadd.xlane.f32.xlu0 %v962
      %v969 = vpop.xlane.xlu0 %968
      %970 = vadd.xlane.f32.xlu0 %v963
      %v971 = vpop.xlane.xlu0 %970
      %v972 = vsub.f32 %v785, %v810
      %v973 = vsub.f32 %v786, %v812
      %v974 = vsub.f32 %v787, %v814
      %v975 = vsub.f32 %v788, %v816
      %v976 = vsub.f32 %v936, %v965
      %v977 = vsub.f32 %v937, %v967
      %v978 = vsub.f32 %v938, %v969
      %v979 = vsub.f32 %v939, %v971
      %v980 = vadd.f32 %v972, %v976
      %v981 = vadd.f32 %v973, %v977
      %v982 = vadd.f32 %v974, %v978
      %v983 = vadd.f32 %v975, %v979
      %v984 = vmul.f32 %v980, %v740
      %v985 = vmul.f32 %v981, %v741
      %v986 = vmul.f32 %v982, %v742
      %v987 = vmul.f32 %v983, %v743
      %vm988 = vcmask 7168
      %v989 = vsel %vm988, %v984, 0.0
      %v990 = vsel %vm988, %v985, 0.0
      %v991 = vadd.f32 %v989, %v990
      %v992 = vsel %vm988, %v986, 0.0
      %v993 = vadd.f32 %v991, %v992
      %v994 = vsel %vm988, %v987, 0.0
      %v995 = vadd.f32 %v993, %v994
      %996 = vadd.xlane.f32.xlu0 %v995
      %v997 = vpop.xlane.xlu0 %996
      %v998 = vrot.slane %v997, 4
      %v999 = vadd.f32 %v997, %v998
      %v1000 = vrot.slane %v999, 2
      %v1001 = vadd.f32 %v999, %v1000
      %v1002 = vrot.slane %v1001, 1
      %v1003 = vadd.f32 %v1001, %v1002
      %s1004 = vtos %v1003
      %v1005 = vmul.f32 %v889, %v740
      %v1006 = vmul.f32 %v890, %v741
      %v1007 = vmul.f32 %v891, %v742
      %v1008 = vmul.f32 %v892, %v743
      %v1009 = vsel %vm988, %v1005, 0.0
      %v1010 = vsel %vm988, %v1006, 0.0
      %v1011 = vadd.f32 %v1009, %v1010
      %v1012 = vsel %vm988, %v1007, 0.0
      %v1013 = vadd.f32 %v1011, %v1012
      %v1014 = vsel %vm988, %v1008, 0.0
      %v1015 = vadd.f32 %v1013, %v1014
      %1016 = vadd.xlane.f32.xlu0 %v1015
      %v1017 = vpop.xlane.xlu0 %1016
      %v1018 = vrot.slane %v1017, 4
      %v1019 = vadd.f32 %v1017, %v1018
      %v1020 = vrot.slane %v1019, 2
      %v1021 = vadd.f32 %v1019, %v1020
      %v1022 = vrot.slane %v1021, 1
      %v1023 = vadd.f32 %v1021, %v1022
      %s1024 = vtos %v1023
      %vm1025 = vcmp.eq.s32.totalorder %v716, 0
      %vm1026 = vcmp.eq.s32.totalorder %v716, 1
      %v1027 = vstv %s1024
      %v1028 = vsel %vm1026, %v1027, 0.0
      %v1029 = vstv %s1004
      %v1030 = vsel %vm1025, %v1029, %v1028
      %vm1031 = vcmp.eq.s32.totalorder %v722, 0
      %v1032 = vsel %vm1031, %v1030, 0.0
      %1033 = vst [vmem:[%s349] sm:$0xff] %v1032
      %p1034 = scmp.lt.s32.totalorder %s19, 3
      %s1035 = scalar_select %p1034, %s19, 3
      %s1036 = smul.addr %s1035, 8
      %s1037 = scalar_lea.vmem %s8, %s1036
      // Predicated region
      $region53: #{graph_reconstruction_head.1} parent=51 // pred_check
        %p1038 = pneg %p220
      $region54: #{graph_reconstruction_head.1} parent=51 // pred_check_branch
        %1040 = sbr.rel (%p1038) target = $region56
      $region55: #{graph_reconstruction_head.1} parent=51 // pred_region
        _
      $region56: #{graph_reconstruction_head.1} parent=51 // pred_fallthru
        _
    $region52: #{graph_reconstruction_head.1} parent=5 // pred_fallthru
      _
    %p1041 = scmp.le.s32.totalorder 2, %s14
    // Predicated region
    $region57: #{graph_reconstruction_head.1} parent=5 // pred_check
      %p1042 = pneg %p1041
    $region58: #{graph_reconstruction_head.1} parent=5 // pred_check_branch
      %1044 = sbr.rel (%p1042) target = $region60
    $region59: #{graph_reconstruction_head.1} parent=5 // pred_region
      %s1045 = ssub.s32 %s14, 2
      // Predicated region
      $region61: #{graph_reconstruction_head.1} parent=59 // pred_check
        %p1046 = pneg %p226
      $region62: #{graph_reconstruction_head.1} parent=59 // pred_check_branch
        %1048 = sbr.rel (%p1046) target = $region64
      $region63: #{graph_reconstruction_head.1} parent=59 // pred_region
        %p1049 = scmp.lt.s32.totalorder %s20, 3
        %s1050 = scalar_select %p1049, %s20, 3
        %s1051 = smul.addr %s1050, 8
        %s1052 = scalar_lea.vmem %s8, %s1051
      $region64: #{graph_reconstruction_head.1} parent=59 // pred_fallthru
        _
    $region60: #{graph_reconstruction_head.1} parent=5 // pred_fallthru
      _
  $region6: #{graph_reconstruction_head.1} parent=0 // loop_footer
    %s18 = sadd.s32 1, %s14
  $region7: #{graph_reconstruction_head.1} parent=0 // loop_footer_branch
    %13 = sbr.rel target = $region3
  $region8: #{graph_reconstruction_head.1} parent=0 // loop_exit
    _

</llo_original>
